<compile_context>
chip_gen: v7x
topology: tpu7x:2x2x1
jax: 0.10.0
libtpu: 0.0.40
codegen_flags: <defaults>
</compile_context>

<pallas_src>
import functools

import jax
import jax.numpy as jnp
from jax.experimental import pallas as pl
from jax.experimental.pallas import tpu as pltpu


# ---------------------------------------------------------------------------
# Kernels
# ---------------------------------------------------------------------------

def _ln_rows_kernel(x_ref, o_ref, *, eps, d):
    """Standard path: (TILE_ROWS, D) tile, per-row reduce over the last (lane) axis.

    Two-pass (reference) form: mean, center, then mean of squares of the centered
    values.  The extra pass is free under the DMA window and avoids the E[x^2]-mean^2
    cancellation issue entirely.
    """
    x = x_ref[...].astype(jnp.float32)
    inv_d = 1.0 / float(d)
    mean = jnp.sum(x, axis=-1, keepdims=True) * inv_d
    xc = x - mean
    var = jnp.sum(xc * xc, axis=-1, keepdims=True) * inv_d
    o_ref[...] = (xc * jax.lax.rsqrt(var + eps)).astype(o_ref.dtype)


def _ln_packed_kernel(x_ref, seg_ref, o_ref, *, eps, d):
    """Lane-packed path for small d_model (d < 128, 128 % d == 0).

    Each 128-lane row of the tile holds 128//d consecutive logical (b,p) rows, each
    occupying d consecutive lanes.  Segmented sums are computed with MXU matmuls
    against a resident block-diagonal ones matrix (passed in as `seg_ref`, DMA'd once
    thanks to its constant index_map), which also broadcasts each segment's sum back
    across its own lanes, so everything stays lane-dense (TILE, 128).
    """
    x = x_ref[...]
    seg = seg_ref[...]
    # Feed the MXU in the narrow native dtype (bf16 stays bf16); accumulate in f32.
    if x.dtype != seg.dtype:
        x = x.astype(seg.dtype)
    inv_d = 1.0 / float(d)
    s = jnp.dot(x, seg, preferred_element_type=jnp.float32)        # per-segment sum
    ss = jnp.dot(x * x, seg, preferred_element_type=jnp.float32)   # per-segment sumsq
    mean = s * inv_d
    # Clamp: single-pass variance can go slightly negative from cancellation.
    var = jnp.maximum(ss * inv_d - mean * mean, 0.0)
    xf = x_ref[...].astype(jnp.float32)
    o_ref[...] = ((xf - mean) * jax.lax.rsqrt(var + eps)).astype(o_ref.dtype)


# ---------------------------------------------------------------------------
# Tile sizing (generation-aware: v7x has 64 MiB VMEM, v5e/v6e have 128 MiB)
# ---------------------------------------------------------------------------

def _vmem_capacity_bytes():
    try:
        info = pltpu.get_tpu_info()
        cap = getattr(info, "vmem_capacity_bytes", None)
        if cap:
            return int(cap)
    except Exception:
        pass
    return 64 << 20  # conservative fallback (v7x per-TensorCore VMEM)


def _pick_tiling(n_rows, d_eff, itemsize):
    phys = _vmem_capacity_bytes()
    # Above the 16/32 MiB scoped defaults, below physical, capped at 80 MiB: large
    # tiles already reach ~85% of HBM roofline, extra scoped VMEM only hurts when this
    # kernel is embedded in a larger program.
    vmem_limit = int(min(phys * 3 // 4, 80 << 20))

    # Per-row VMEM footprint: double-buffered input + output blocks plus ~3 tile-sized
    # f32 temporaries (upcast x, centered x, squares) live inside the body.
    per_row = 2 * 2 * d_eff * itemsize + 3 * d_eff * 4

    # As many rows as the budget allows (leave ~25% headroom for the compiler). With
    # these numbers the input block lands around 5-15 MiB on all generations, which is
    # past the ~4 MiB knee where per-step overhead (~0.35 us) stops mattering.
    budget_rows = max(8, int((vmem_limit * 3 // 4) // per_row))
    # ...but keep >= ~8 grid steps: pipeline stages for DMA overlap and, on v7x, work
    # for both TensorCores via the "parallel" grid axis.
    split_rows = max(8, int(pl.cdiv(n_rows, 8)))

    tile = min(budget_rows, split_rows, n_rows)
    if tile >= n_rows:
        tile = n_rows                    # single block == full array (always legal)
    else:
        tile = max(8, (tile // 8) * 8)   # keep the (8, 128) tiling constraint
    return tile, vmem_limit


# ---------------------------------------------------------------------------
# Wrapper
# ---------------------------------------------------------------------------

def layernorm_pallas(residual, eps):
    """residual: (B, P, D). Returns (residual - mean_d) / sqrt(mean_d(xc^2) + eps)."""
    B, P, D = residual.shape
    out_dtype = residual.dtype
    itemsize = jnp.dtype(out_dtype).itemsize
    n_rows = B * P
    x2d = residual.reshape(n_rows, D)

    packed = (D < 128) and (128 % D == 0) and ((n_rows * D) % 128 == 0)
    if packed:
        d_eff = 128
        rows = (n_rows * D) // 128
        x_in = x2d.reshape(rows, 128)
        # Block-diagonal ones matrix built once on the host (not per grid step).
        seg_dtype = jnp.bfloat16 if out_dtype == jnp.bfloat16 else jnp.float32
        lane_seg = jnp.arange(128, dtype=jnp.int32) // D
        seg = (lane_seg[:, None] == lane_seg[None, :]).astype(seg_dtype)
        kernel = functools.partial(_ln_packed_kernel, eps=float(eps), d=D)
    else:
        d_eff = D
        rows = n_rows
        x_in = x2d
        seg = None
        kernel = functools.partial(_ln_rows_kernel, eps=float(eps), d=D)

    tile, vmem_limit = _pick_tiling(rows, d_eff, itemsize)
    grid = int(pl.cdiv(rows, tile))  # partial last block is fine: rows are independent

    in_specs = [pl.BlockSpec((tile, d_eff), lambda i: (i, 0))]
    operands = [x_in]
    if packed:
        # Constant index_map -> the (128,128) seg block stays VMEM-resident (fetched
        # once), instead of being rebuilt by VPU iota/compare ops every grid step.
        in_specs.append(pl.BlockSpec((128, 128), lambda i: (0, 0)))
        operands.append(seg)

    out = pl.pallas_call(
        kernel,
        out_shape=jax.ShapeDtypeStruct((rows, d_eff), out_dtype),
        grid_spec=pltpu.PrefetchScalarGridSpec(
            num_scalar_prefetch=0,
            grid=(grid,),
            in_specs=in_specs,
            out_specs=pl.BlockSpec((tile, d_eff), lambda i: (i, 0)),
        ),
        compiler_params=pltpu.CompilerParams(
            dimension_semantics=("parallel",),
            vmem_limit_bytes=vmem_limit,
        ),
    )(*operands)

    return out.reshape(B, P, D)


def layernorm_reference(residual, eps):
    mean = jnp.mean(residual, axis=-1, keepdims=True)
    xc = residual - mean
    scale = jnp.sqrt(jnp.mean(xc * xc, axis=-1, keepdims=True) + eps)
    return xc / scale


if __name__ == "__main__":
    # cfg: d_model=32, ln_eps=1e-5 ; small shapes: batch=2, pos=8
    d_model = 32
    ln_eps = 1e-5
    batch, pos = 2, 8

    # Parameters exist in the module __init__ but forward() never applies them.
    w = jnp.ones((d_model,), dtype=jnp.float32)
    b = jnp.zeros((d_model,), dtype=jnp.float32)

    key = jax.random.PRNGKey(0)
    residual = jax.random.normal(key, (batch, pos, d_model), dtype=jnp.float32)

    out = layernorm_pallas(residual, ln_eps)
    out = jax.block_until_ready(out)

    ref = layernorm_reference(residual, ln_eps)
    assert out.shape == (batch, pos, d_model)
    assert jnp.allclose(out, ref, atol=1e-5, rtol=1e-5), "mismatch vs reference"

    print("KERNEL_OK")
</pallas_src>

<mosaic_0001>
module attributes {stable_mosaic.version = 11 : i64} {
  func.func @_ln_packed_kernel(%arg0: i32, %arg1: memref<4x128xf32, #tpu.memory_space<vmem>>, %arg2: memref<128x128xf32, #tpu.memory_space<vmem>>, %arg3: memref<4x128xf32, #tpu.memory_space<vmem>>) attributes {dimension_semantics = [#tpu.dimension_semantics<parallel>], iteration_bounds = array<i64: 1>, scalar_prefetch = 0 : i64, scratch_operands = 0 : i64, tpu.core_type = #tpu.core_type<tc>, window_params = [{transform_indices = @transform_0, window_bounds = array<i64: 4, 128>}, {pipeline_mode = #tpu.pipeline_mode<synchronous>, transform_indices = @transform_1, window_bounds = array<i64: 128, 128>}, {transform_indices = @transform_2, window_bounds = array<i64: 4, 128>}]} {
    %c0 = arith.constant 0 : index
    %c0_0 = arith.constant 0 : index
    %0 = vector.load %arg1[%c0, %c0_0] : memref<4x128xf32, #tpu.memory_space<vmem>>, vector<4x128xf32>
    %c0_1 = arith.constant 0 : index
    %c0_2 = arith.constant 0 : index
    %1 = vector.load %arg2[%c0_1, %c0_2] : memref<128x128xf32, #tpu.memory_space<vmem>>, vector<128x128xf32>
    %cst = arith.constant dense<0.000000e+00> : vector<4x128xf32>
    %2 = tpu.matmul %0, %1, %cst {dimension_numbers = #tpu.dot_dimension_numbers<[1], [0], [0], [1], [0, 0, 1, 1], [], []>} : vector<4x128xf32>, vector<128x128xf32>, vector<4x128xf32> -> vector<4x128xf32>
    %3 = arith.mulf %0, %0 : vector<4x128xf32>
    %cst_3 = arith.constant dense<0.000000e+00> : vector<4x128xf32>
    %4 = tpu.matmul %3, %1, %cst_3 {dimension_numbers = #tpu.dot_dimension_numbers<[1], [0], [0], [1], [0, 0, 1, 1], [], []>} : vector<4x128xf32>, vector<128x128xf32>, vector<4x128xf32> -> vector<4x128xf32>
    %cst_4 = arith.constant 3.125000e-02 : f32
    %5 = vector.broadcast %cst_4 : f32 to vector<4x128xf32>
    %6 = arith.mulf %2, %5 : vector<4x128xf32>
    %cst_5 = arith.constant 3.125000e-02 : f32
    %7 = vector.broadcast %cst_5 : f32 to vector<4x128xf32>
    %8 = arith.mulf %4, %7 : vector<4x128xf32>
    %9 = arith.mulf %6, %6 : vector<4x128xf32>
    %10 = arith.subf %8, %9 : vector<4x128xf32>
    %cst_6 = arith.constant 0.000000e+00 : f32
    %11 = vector.broadcast %cst_6 : f32 to vector<4x128xf32>
    %12 = arith.maximumf %10, %11 : vector<4x128xf32>
    %c0_7 = arith.constant 0 : index
    %c0_8 = arith.constant 0 : index
    %13 = vector.load %arg1[%c0_7, %c0_8] : memref<4x128xf32, #tpu.memory_space<vmem>>, vector<4x128xf32>
    %14 = arith.subf %13, %6 : vector<4x128xf32>
    %cst_9 = arith.constant 9.99999974E-6 : f32
    %15 = vector.broadcast %cst_9 : f32 to vector<4x128xf32>
    %16 = arith.addf %12, %15 : vector<4x128xf32>
    %17 = math.rsqrt %16 : vector<4x128xf32>
    %18 = arith.mulf %14, %17 : vector<4x128xf32>
    %c0_10 = arith.constant 0 : index
    %c0_11 = arith.constant 0 : index
    %19 = vector.load %arg3[%c0_10, %c0_11] : memref<4x128xf32, #tpu.memory_space<vmem>>, vector<4x128xf32>
    tpu.vector_store %arg3[%c0_10, %c0_11], %18 {strides = array<i32>} : memref<4x128xf32, #tpu.memory_space<vmem>>, vector<4x128xf32>,
    return
  }
  func.func @transform_0(%arg0: i32) -> (i32, i32) {
    %c0_i32 = arith.constant 0 : i32
    %c0_i32_0 = arith.constant 0 : i32
    return %arg0, %c0_i32 : i32, i32
  }
  func.func @transform_1(%arg0: i32) -> (i32, i32) {
    %c0_i32 = arith.constant 0 : i32
    %c0_i32_0 = arith.constant 0 : i32
    %c0_i32_1 = arith.constant 0 : i32
    return %c0_i32, %c0_i32_0 : i32, i32
  }
  func.func @transform_2(%arg0: i32) -> (i32, i32) {
    %c0_i32 = arith.constant 0 : i32
    %c0_i32_0 = arith.constant 0 : i32
    return %arg0, %c0_i32 : i32, i32
  }
}

</mosaic_0001>

<llo_original>
// kernel: tpu_custom_call.1
$region0: #{tpu_custom_call.1}
  #allocation0 [shape = 'u32[]', space=smem, size = 0x4, offset = 0x4, fixed_abs, tag = 'smem constant byte address 0x4 - core index']
  #allocation1 [shape = 'u32[144,128]{1,0:T(1,128)}', space=vmem, size = 0x12000, scoped, tag = 'internal scratch']
  %s0 = inlined_call_operand.hbm [shape: f32[4,128], index: 0, kind: input, shape index: {}]
  %s1 = inlined_call_operand.hbm [shape: f32[128,128], index: 1, kind: input, shape index: {}]
  %s2 = inlined_call_operand.hbm [shape: f32[4,128], index: 2, kind: output, shape index: {}]
  %s3 = sld [smem:[#allocation0]]
  $region26: #{tpu_custom_call.1} parent=0
    _
  %s5 = ssub.s32 1, %s3
  %s6 = scalar_select 0, %s5, %s3
  $region1: #{tpu_custom_call.1} parent=0
    #allocation2 [shape = 'u8[2048]{0}', space=vmem, size = 0x800, scoped, tag = 'input window, operand 0, single buffered']
    #allocation3 [shape = 's32[1]{0}', space=sflag, size = 0x4, scoped, tag = 'scoped memory for tpu_custom_call.1']
    #allocation4 [shape = 's32[1]{0}', space=sflag, size = 0x4, scoped, tag = 'scoped memory for tpu_custom_call.1']
    #allocation5 [shape = 'u8[65536]{0}', space=vmem, size = 0x10000, scoped, tag = 'input window, operand 1, single buffered']
    #allocation6 [shape = 's32[1]{0}', space=sflag, size = 0x4, scoped, tag = 'scoped memory for tpu_custom_call.1']
    #allocation7 [shape = 'u8[2048]{0}', space=vmem, size = 0x800, scoped, tag = 'output window, operand 0, single buffered']
    %7 = vsyncpa [#allocation3], 0
    %8 = vsyncpa [#allocation6], 0
    %9 = vsyncpa [#allocation4], 0
    // Predicated region
    $region2: #{tpu_custom_call.1} parent=1 // pred_check
      _
    $region3: #{tpu_custom_call.1} parent=1 // pred_check_branch
      %11 = sbr.rel (0) target = $region5
    $region4: #{tpu_custom_call.1} parent=1 // pred_region
      %s13 = ssub.s32 64, 64
      %14 = vsyncadd [#allocation3], %s13
      %s16 = sshll.u32 [#allocation2], 4
      %s17 = int_to_ptr.vmem [resolvable:$true] %s16
      %19 = dma.hbm_to_vmem [thread:$0]  %s0, 64, %s17, [#allocation3]
    $region5: #{tpu_custom_call.1} parent=1 // pred_fallthru
      _
    // Predicated region
    $region6: #{tpu_custom_call.1} parent=1 // pred_check
      _
    $region7: #{tpu_custom_call.1} parent=1 // pred_check_branch
      %21 = sbr.rel (0) target = $region9
    $region8: #{tpu_custom_call.1} parent=1 // pred_region
      %s23 = ssub.s32 2048, 2048
      %24 = vsyncadd [#allocation6], %s23
      %s25 = sshll.u32 [#allocation5], 4
      %s26 = int_to_ptr.vmem [resolvable:$true] %s25
      %31 = dma.hbm_to_vmem [thread:$0]  %s1, 2048, %s26, [#allocation6], 128, 128, 8
    $region9: #{tpu_custom_call.1} parent=1 // pred_fallthru
      _
    // Predicated region
    $region10: #{tpu_custom_call.1} parent=1 // pred_check
      _
    $region11: #{tpu_custom_call.1} parent=1 // pred_check_branch
      %33 = sbr.rel (0) target = $region13
    $region12: #{tpu_custom_call.1} parent=1 // pred_region
      %34 = dma.done [#allocation3], 64
    $region13: #{tpu_custom_call.1} parent=1 // pred_fallthru
      _
    // Predicated region
    $region14: #{tpu_custom_call.1} parent=1 // pred_check
      _
    $region15: #{tpu_custom_call.1} parent=1 // pred_check_branch
      %36 = sbr.rel (0) target = $region17
    $region16: #{tpu_custom_call.1} parent=1 // pred_region
      %37 = dma.done [#allocation6], 2048
    $region17: #{tpu_custom_call.1} parent=1 // pred_fallthru
      _
    %v38 = vld [vmem:[#allocation2] sm:$0xf]
    %v39 = vld [vmem:[#allocation5] sm:$0xff]
    %v40 = vld [vmem:[#allocation5 + $0x8] sm:$0xff]
    %v41 = vld [vmem:[#allocation5 + $0x10] sm:$0xff]
    %v42 = vld [vmem:[#allocation5 + $0x18] sm:$0xff]
    %v43 = vld [vmem:[#allocation5 + $0x20] sm:$0xff]
    %v44 = vld [vmem:[#allocation5 + $0x28] sm:$0xff]
    %v45 = vld [vmem:[#allocation5 + $0x30] sm:$0xff]
    %v46 = vld [vmem:[#allocation5 + $0x38] sm:$0xff]
    %v47 = vld [vmem:[#allocation5 + $0x40] sm:$0xff]
    %v48 = vld [vmem:[#allocation5 + $0x48] sm:$0xff]
    %v49 = vld [vmem:[#allocation5 + $0x50] sm:$0xff]
    %v50 = vld [vmem:[#allocation5 + $0x58] sm:$0xff]
    %v51 = vld [vmem:[#allocation5 + $0x60] sm:$0xff]
    %v52 = vld [vmem:[#allocation5 + $0x68] sm:$0xff]
    %v53 = vld [vmem:[#allocation5 + $0x70] sm:$0xff]
    %v54 = vld [vmem:[#allocation5 + $0x78] sm:$0xff]
    %55 = vmatprep.subr.mxu0 0.0
    %56 = vmatpush1.msra.mxu0 %v39
    %57 = vmatprep.subr.mxu0 0.0
    %58 = vmatpush1.msra.mxu0 %v40
    %59 = vmatprep.subr.mxu0 0.0
    %60 = vmatpush1.msra.mxu0 %v41
    %61 = vmatprep.subr.mxu0 0.0
    %62 = vmatpush1.msra.mxu0 %v42
    %63 = vmatprep.subr.mxu0 0.0
    %64 = vmatpush1.msra.mxu0 %v43
    %65 = vmatprep.subr.mxu0 0.0
    %66 = vmatpush1.msra.mxu0 %v44
    %67 = vmatprep.subr.mxu0 0.0
    %68 = vmatpush1.msra.mxu0 %v45
    %69 = vmatprep.subr.mxu0 0.0
    %70 = vmatpush1.msra.mxu0 %v46
    %71 = vmatprep.subr.mxu0 0.0
    %72 = vmatpush1.msra.mxu0 %v47
    %73 = vmatprep.subr.mxu0 0.0
    %74 = vmatpush1.msra.mxu0 %v48
    %75 = vmatprep.subr.mxu0 0.0
    %76 = vmatpush1.msra.mxu0 %v49
    %77 = vmatprep.subr.mxu0 0.0
    %78 = vmatpush1.msra.mxu0 %v50
    %79 = vmatprep.subr.mxu0 0.0
    %80 = vmatpush1.msra.mxu0 %v51
    %81 = vmatprep.subr.mxu0 0.0
    %82 = vmatpush1.msra.mxu0 %v52
    %83 = vmatprep.subr.mxu0 0.0
    %84 = vmatpush1.msra.mxu0 %v53
    %85 = vmatprep.subr.mxu0 0.0
    %86 = vmatpush1.msra.mxu0 %v54
    %87 = vmatprep.subr.mxu0 0.0
    %88 = vmatpush1.msra.mxu0 0.0
    %89 = vmatprep.subr.mxu0 0.0
    %90 = vmatpush1.msra.mxu0 0.0
    %91 = vmatprep.subr.mxu0 0.0
    %92 = vmatpush1.msra.mxu0 0.0
    %93 = vmatprep.subr.mxu0 0.0
    %94 = vmatpush1.msra.mxu0 0.0
    %95 = vmatprep.subr.mxu0 0.0
    %96 = vmatpush1.msra.mxu0 0.0
    %97 = vmatprep.subr.mxu0 0.0
    %98 = vmatpush1.msra.mxu0 0.0
    %99 = vmatprep.subr.mxu0 0.0
    %100 = vmatpush1.msra.mxu0 0.0
    %101 = vmatprep.subr.mxu0 0.0
    %102 = vmatpush1.msra.mxu0 0.0
    %103 = vmatprep.subr.mxu0 0.0
    %104 = vmatpush1.msra.mxu0 0.0
    %105 = vmatprep.subr.mxu0 0.0
    %106 = vmatpush1.msra.mxu0 0.0
    %107 = vmatprep.subr.mxu0 0.0
    %108 = vmatpush1.msra.mxu0 0.0
    %109 = vmatprep.subr.mxu0 0.0
    %110 = vmatpush1.msra.mxu0 0.0
    %111 = vmatprep.subr.mxu0 0.0
    %112 = vmatpush1.msra.mxu0 0.0
    %113 = vmatprep.subr.mxu0 0.0
    %114 = vmatpush1.msra.mxu0 0.0
    %115 = vmatprep.subr.mxu0 0.0
    %116 = vmatpush1.msra.mxu0 0.0
    %117 = vmatprep.subr.mxu0 0.0
    %118 = vmatpush1.msra.mxu0 0.0
    %119 = vmatprep.mubr.f32.mxu0 0.0
    %120 = vmatmul.mubr.f32.gmra.mrb[0].mxu0 %v38
    %v121 = vpop.f32.mrb[0].mxu0
    %v122 = vadd.f32 0.0, %v121
    %v123 = vpop.f32.mrb[0].mxu0
    %124 = vdwg.mxu0
    %v125 = vmul.f32 %v38, %v38
    %126 = vmatprep.subr.mxu0 0.0
    %127 = vmatpush1.msra.mxu0 %v39
    %128 = vmatprep.subr.mxu0 0.0
    %129 = vmatpush1.msra.mxu0 %v40
    %130 = vmatprep.subr.mxu0 0.0
    %131 = vmatpush1.msra.mxu0 %v41
    %132 = vmatprep.subr.mxu0 0.0
    %133 = vmatpush1.msra.mxu0 %v42
    %134 = vmatprep.subr.mxu0 0.0
    %135 = vmatpush1.msra.mxu0 %v43
    %136 = vmatprep.subr.mxu0 0.0
    %137 = vmatpush1.msra.mxu0 %v44
    %138 = vmatprep.subr.mxu0 0.0
    %139 = vmatpush1.msra.mxu0 %v45
    %140 = vmatprep.subr.mxu0 0.0
    %141 = vmatpush1.msra.mxu0 %v46
    %142 = vmatprep.subr.mxu0 0.0
    %143 = vmatpush1.msra.mxu0 %v47
    %144 = vmatprep.subr.mxu0 0.0
    %145 = vmatpush1.msra.mxu0 %v48
    %146 = vmatprep.subr.mxu0 0.0
    %147 = vmatpush1.msra.mxu0 %v49
    %148 = vmatprep.subr.mxu0 0.0
    %149 = vmatpush1.msra.mxu0 %v50
    %150 = vmatprep.subr.mxu0 0.0
    %151 = vmatpush1.msra.mxu0 %v51
    %152 = vmatprep.subr.mxu0 0.0
    %153 = vmatpush1.msra.mxu0 %v52
    %154 = vmatprep.subr.mxu0 0.0
    %155 = vmatpush1.msra.mxu0 %v53
    %156 = vmatprep.subr.mxu0 0.0
    %157 = vmatpush1.msra.mxu0 %v54
    %158 = vmatprep.subr.mxu0 0.0
    %159 = vmatpush1.msra.mxu0 0.0
    %160 = vmatprep.subr.mxu0 0.0
    %161 = vmatpush1.msra.mxu0 0.0
    %162 = vmatprep.subr.mxu0 0.0
    %163 = vmatpush1.msra.mxu0 0.0
    %164 = vmatprep.subr.mxu0 0.0
    %165 = vmatpush1.msra.mxu0 0.0
    %166 = vmatprep.subr.mxu0 0.0
    %167 = vmatpush1.msra.mxu0 0.0
    %168 = vmatprep.subr.mxu0 0.0
    %169 = vmatpush1.msra.mxu0 0.0
    %170 = vmatprep.subr.mxu0 0.0
    %171 = vmatpush1.msra.mxu0 0.0
    %172 = vmatprep.subr.mxu0 0.0
    %173 = vmatpush1.msra.mxu0 0.0
    %174 = vmatprep.subr.mxu0 0.0
    %175 = vmatpush1.msra.mxu0 0.0
    %176 = vmatprep.subr.mxu0 0.0
    %177 = vmatpush1.msra.mxu0 0.0
    %178 = vmatprep.subr.mxu0 0.0
    %179 = vmatpush1.msra.mxu0 0.0
    %180 = vmatprep.subr.mxu0 0.0
    %181 = vmatpush1.msra.mxu0 0.0
    %182 = vmatprep.subr.mxu0 0.0
    %183 = vmatpush1.msra.mxu0 0.0
    %184 = vmatprep.subr.mxu0 0.0
    %185 = vmatpush1.msra.mxu0 0.0
    %186 = vmatprep.subr.mxu0 0.0
    %187 = vmatpush1.msra.mxu0 0.0
    %188 = vmatprep.subr.mxu0 0.0
    %189 = vmatpush1.msra.mxu0 0.0
    %190 = vmatprep.mubr.f32.mxu0 0.0
    %191 = vmatmul.mubr.f32.gmra.mrb[0].mxu0 %v125
    %v192 = vpop.f32.mrb[0].mxu0
    %v193 = vadd.f32 0.0, %v192
    %v194 = vpop.f32.mrb[0].mxu0
    %195 = vdwg.mxu0
    %v196 = vmul.f32 %v122, 0.03125
    %v197 = vmul.f32 %v193, 0.03125
    %v198 = vmul.f32 %v196, %v196
    %v199 = vsub.f32 %v197, %v198
    %v200 = vmax.f32 %v199, 0.0
    %v201 = vsub.f32 %v38, %v196
    %v202 = vadd.f32 %v200, 1e-05
    %v203 = vrsqrt.pop %v202
    %v204 = vmul.f32 %v201, %v203
    %205 = vst [vmem:[#allocation7] sm:$0xf] %v204
    // Predicated region
    $region18: #{tpu_custom_call.1} parent=1 // pred_check
      _
    $region19: #{tpu_custom_call.1} parent=1 // pred_check_branch
      %207 = sbr.rel (0) target = $region21
    $region20: #{tpu_custom_call.1} parent=1 // pred_region
      %s209 = ssub.s32 64, 64
      %210 = vsyncadd [#allocation4], %s209
      %s212 = sshll.u32 [#allocation7], 4
      %s213 = int_to_ptr.vmem [resolvable:$true] %s212
      %215 = dma.vmem_to_hbm [thread:$0]  %s213, 64, %s2, [#allocation4]
    $region21: #{tpu_custom_call.1} parent=1 // pred_fallthru
      _
    // Predicated region
    $region22: #{tpu_custom_call.1} parent=1 // pred_check
      _
    $region23: #{tpu_custom_call.1} parent=1 // pred_check_branch
      %217 = sbr.rel (0) target = $region25
    $region24: #{tpu_custom_call.1} parent=1 // pred_region
      %218 = dma.done [#allocation4], 64
    $region25: #{tpu_custom_call.1} parent=1 // pred_fallthru
      _
    %219 = vsyncpa [#allocation3], 1
    %220 = vsyncpa [#allocation6], 1
    %221 = vsyncpa [#allocation4], 1

</llo_original>
